<compile_context>
chip_gen: v7x
topology: tpu7x:2x2x1
jax: 0.10.0
libtpu: 0.0.40
codegen_flags: <defaults>
</compile_context>

<pallas_src>
import functools

import jax
import jax.numpy as jnp
from jax.experimental import pallas as pl
from jax.experimental.pallas import tpu as pltpu


def _pick_block(dim: int, align: int, max_blk: int) -> int:
    """Largest block <= max_blk that is a multiple of `align` and divides `dim`.

    Falls back to the full dimension (always a legal block size)."""
    if dim <= max_blk or dim % align != 0:
        return dim
    blk = (max_blk // align) * align
    while blk >= align:
        if dim % blk == 0:
            return blk
        blk -= align
    return dim


# ----------------------------------------------------------------------------
# Pass 1: per-channel sum / sum-of-squares reduction.
# ----------------------------------------------------------------------------
def _stats_kernel(x_ref, sum_ref, sumsq_ref, acc_sum, acc_sq):
    # x_ref: (C_blk, HW_blk)  (N axis squeezed); acc_*: (C_blk, 1) f32 scratch.
    n = pl.program_id(1)
    h = pl.program_id(2)

    @pl.when(jnp.logical_and(n == 0, h == 0))
    def _init():
        acc_sum[...] = jnp.zeros_like(acc_sum)
        acc_sq[...] = jnp.zeros_like(acc_sq)

    x = x_ref[...].astype(jnp.float32)
    acc_sum[...] += jnp.sum(x, axis=-1, keepdims=True)
    acc_sq[...] += jnp.sum(x * x, axis=-1, keepdims=True)

    @pl.when(jnp.logical_and(n == pl.num_programs(1) - 1,
                             h == pl.num_programs(2) - 1))
    def _finalize():
        sum_ref[...] = acc_sum[...]
        sumsq_ref[...] = acc_sq[...]


# ----------------------------------------------------------------------------
# Pass 2: streaming per-channel affine apply  y = A * x + B.
# ----------------------------------------------------------------------------
def _apply_kernel(x_ref, a_ref, b_ref, y_ref):
    # x_ref/y_ref: (C_blk, HW_blk); a_ref/b_ref: (C_blk, 1) f32.
    x = x_ref[...].astype(jnp.float32)
    y_ref[...] = (x * a_ref[...] + b_ref[...]).astype(y_ref.dtype)


def batch_renorm2d(x, weight, bias, running_mean, running_var,
                   *, r_max, d_max, eps=1e-6, momentum=0.1, training=True):
    """BatchRenorm2D forward.

    x:            (N, C, H, W)
    weight, bias: (C,)
    running_mean, running_var: (1, C, 1, 1)
    Returns (y, new_running_mean, new_running_var).
    """
    N, C, H, W = x.shape
    HW = H * W
    M = N * HW

    # Free views -- no data movement.
    x_v = x.reshape(N, C, HW)

    c_blk = _pick_block(C, 8, 64)
    hw_blk = _pick_block(HW, 128, 2048)
    n_c = C // c_blk
    n_hw = HW // hw_blk

    x_spec = pl.BlockSpec((None, c_blk, hw_blk), lambda c, n, h: (n, c, h))
    cvec_spec = pl.BlockSpec((c_blk, 1), lambda c, n, h: (c, 0))

    itemsize = jnp.dtype(x.dtype).itemsize
    vmem_limit = 32 * 1024 * 1024  # small tiles; safe on v5e/v6e/v7x

    rm = running_mean.reshape(C, 1).astype(jnp.float32)
    rv = running_var.reshape(C, 1).astype(jnp.float32)
    w = weight.reshape(C, 1).astype(jnp.float32)
    b = bias.reshape(C, 1).astype(jnp.float32)

    if training:
        s1, s2 = pl.pallas_call(
            _stats_kernel,
            grid=(n_c, N, n_hw),
            in_specs=[x_spec],
            out_specs=[cvec_spec, cvec_spec],
            out_shape=(jax.ShapeDtypeStruct((C, 1), jnp.float32),
                       jax.ShapeDtypeStruct((C, 1), jnp.float32)),
            scratch_shapes=[pltpu.VMEM((c_blk, 1), jnp.float32),
                            pltpu.VMEM((c_blk, 1), jnp.float32)],
            compiler_params=pltpu.CompilerParams(
                dimension_semantics=("parallel", "arbitrary", "arbitrary"),
                vmem_limit_bytes=vmem_limit),
            cost_estimate=pl.CostEstimate(
                flops=3 * N * C * HW,
                transcendentals=0,
                bytes_accessed=N * C * HW * itemsize + 2 * C * 4),
        )(x_v)

        # O(C) stat math -> per-channel affine fold; stays in plain JAX.
        batch_mean = s1 / M
        # Unbiased variance (torch .var() default), via f32 sum / sum-of-squares.
        batch_var = jnp.maximum(s2 - s1 * batch_mean, 0.0) / (M - 1)
        batch_std = jnp.sqrt(batch_var + eps)
        running_std = jnp.sqrt(rv + eps)
        r = jax.lax.stop_gradient(
            jnp.clip(batch_std / running_std, 1.0 / r_max, r_max))
        d = jax.lax.stop_gradient(
            jnp.clip((batch_mean - rm) / running_std, -d_max, d_max))

        scale = r / batch_std                       # == r * rsqrt(var+eps)
        A = w * scale                               # y = A*x + B
        B = w * (d - batch_mean * scale) + b

        # running buffer lerp_ updates
        new_rm = rm + momentum * (batch_mean - rm)
        new_rv = rv + momentum * (batch_var - rv)
    else:
        inv_std = jax.lax.rsqrt(rv + eps)
        A = w * inv_std
        B = b - rm * A
        new_rm, new_rv = rm, rv

    y_v = pl.pallas_call(
        _apply_kernel,
        grid=(n_c, N, n_hw),
        in_specs=[x_spec, cvec_spec, cvec_spec],
        out_specs=x_spec,
        out_shape=jax.ShapeDtypeStruct((N, C, HW), x.dtype),
        compiler_params=pltpu.CompilerParams(
            dimension_semantics=("parallel", "parallel", "arbitrary"),
            vmem_limit_bytes=vmem_limit),
        cost_estimate=pl.CostEstimate(
            flops=2 * N * C * HW,
            transcendentals=0,
            bytes_accessed=2 * N * C * HW * itemsize),
    )(x_v, A, B)

    y = y_v.reshape(N, C, H, W)
    return y, new_rm.reshape(1, C, 1, 1), new_rv.reshape(1, C, 1, 1)


# ----------------------------------------------------------------------------
# Pure-JAX references mirroring the PyTorch module (per-channel weight/bias).
# ----------------------------------------------------------------------------
def _reference_train(x, weight, bias, running_mean, running_var,
                     *, r_max, d_max, eps, momentum):
    batch_mean = jnp.mean(x, axis=(0, 2, 3), keepdims=True)
    centered = x - batch_mean
    n = x.shape[0] * x.shape[2] * x.shape[3]
    batch_var = jnp.sum(centered * centered, axis=(0, 2, 3), keepdims=True) / (n - 1)
    batch_std = jnp.sqrt(batch_var + eps)
    running_std = jnp.sqrt(running_var + eps)
    r = jnp.clip(batch_std / running_std, 1.0 / r_max, r_max)
    d = jnp.clip((batch_mean - running_mean) / running_std, -d_max, d_max)
    xhat = centered / batch_std * r + d
    y = weight.reshape(1, -1, 1, 1) * xhat + bias.reshape(1, -1, 1, 1)
    new_rm = running_mean + momentum * (batch_mean - running_mean)
    new_rv = running_var + momentum * (batch_var - running_var)
    return y, new_rm, new_rv


def _reference_eval(x, weight, bias, running_mean, running_var, *, eps):
    xhat = (x - running_mean) / jnp.sqrt(running_var + eps)
    return weight.reshape(1, -1, 1, 1) * xhat + bias.reshape(1, -1, 1, 1)


if __name__ == "__main__":
    key = jax.random.PRNGKey(0)
    kx, kw, kb = jax.random.split(key, 3)

    N, C, H, W = 2, 4, 16, 16
    r_max, d_max, eps, momentum = 3.0, 5.0, 1e-6, 0.1

    x = jax.random.normal(kx, (N, C, H, W), dtype=jnp.float32) * 2.0 + 0.5
    # nn.Parameter(torch.Tensor(C)) is uninitialized -> deterministic synthetic init
    weight = jax.random.normal(kw, (C,), dtype=jnp.float32)
    bias = jax.random.normal(kb, (C,), dtype=jnp.float32)
    running_mean = jnp.zeros((1, C, 1, 1), dtype=jnp.float32)
    running_var = jnp.ones((1, C, 1, 1), dtype=jnp.float32)

    # --- training-mode forward ---
    y, new_rm, new_rv = batch_renorm2d(
        x, weight, bias, running_mean, running_var,
        r_max=r_max, d_max=d_max, eps=eps, momentum=momentum, training=True)
    jax.block_until_ready((y, new_rm, new_rv))

    y_ref, rm_ref, rv_ref = _reference_train(
        x, weight, bias, running_mean, running_var,
        r_max=r_max, d_max=d_max, eps=eps, momentum=momentum)

    assert jnp.allclose(y, y_ref, atol=1e-4, rtol=1e-4)
    assert jnp.allclose(new_rm, rm_ref, atol=1e-5, rtol=1e-5)
    assert jnp.allclose(new_rv, rv_ref, atol=1e-5, rtol=1e-5)

    # --- eval-mode forward ---
    y_eval, _, _ = batch_renorm2d(
        x, weight, bias, running_mean, running_var,
        r_max=r_max, d_max=d_max, eps=eps, momentum=momentum, training=False)
    jax.block_until_ready(y_eval)
    y_eval_ref = _reference_eval(x, weight, bias, running_mean, running_var, eps=eps)
    assert jnp.allclose(y_eval, y_eval_ref, atol=1e-4, rtol=1e-4)

    print("KERNEL_OK")
</pallas_src>

<mosaic_0001>
module attributes {stable_mosaic.version = 11 : i64} {
  func.func @_stats_kernel(%arg0: i32, %arg1: i32, %arg2: i32, %arg3: memref<1x4x256xf32, #tpu.memory_space<vmem>>, %arg4: memref<4x1xf32, #tpu.memory_space<vmem>>, %arg5: memref<4x1xf32, #tpu.memory_space<vmem>>, %arg6: memref<4x1xf32, #tpu.memory_space<vmem>>, %arg7: memref<4x1xf32, #tpu.memory_space<vmem>>) attributes {dimension_semantics = [#tpu.dimension_semantics<parallel>, #tpu.dimension_semantics<arbitrary>, #tpu.dimension_semantics<arbitrary>], iteration_bounds = array<i64: 1, 2, 1>, scalar_prefetch = 0 : i64, scratch_operands = 2 : i64, tpu.core_type = #tpu.core_type<tc>, window_params = [{transform_indices = @transform_0, window_bounds = array<i64: 1, 4, 256>}, {transform_indices = @transform_1, window_bounds = array<i64: 4, 1>}, {transform_indices = @transform_2, window_bounds = array<i64: 4, 1>}]} {
    %c0_i32 = arith.constant 0 : i32
    %0 = arith.cmpi eq, %arg1, %c0_i32 : i32
    %c0_i32_0 = arith.constant 0 : i32
    %1 = arith.cmpi eq, %arg2, %c0_i32_0 : i32
    %2 = arith.andi %0, %1 : i1
    %3 = arith.extui %2 : i1 to i32
    %c0_i32_1 = arith.constant 0 : i32
    %4 = arith.cmpi ne, %3, %c0_i32_1 : i32
    scf.if %4 {
      %cst_15 = arith.constant 0.000000e+00 : f32
      %23 = vector.broadcast %cst_15 : f32 to vector<4x1xf32>
      %c0_16 = arith.constant 0 : index
      %c0_17 = arith.constant 0 : index
      %24 = vector.load %arg6[%c0_16, %c0_17] : memref<4x1xf32, #tpu.memory_space<vmem>>, vector<4x1xf32>
      tpu.vector_store %arg6[%c0_16, %c0_17], %23 {strides = array<i32>} : memref<4x1xf32, #tpu.memory_space<vmem>>, vector<4x1xf32>,
      %cst_18 = arith.constant 0.000000e+00 : f32
      %25 = vector.broadcast %cst_18 : f32 to vector<4x1xf32>
      %c0_19 = arith.constant 0 : index
      %c0_20 = arith.constant 0 : index
      %26 = vector.load %arg7[%c0_19, %c0_20] : memref<4x1xf32, #tpu.memory_space<vmem>>, vector<4x1xf32>
      tpu.vector_store %arg7[%c0_19, %c0_20], %25 {strides = array<i32>} : memref<4x1xf32, #tpu.memory_space<vmem>>, vector<4x1xf32>,
    } else {
    }
    %c0 = arith.constant 0 : index
    %c0_2 = arith.constant 0 : index
    %c0_3 = arith.constant 0 : index
    %5 = vector.load %arg3[%c0, %c0_2, %c0_3] : memref<1x4x256xf32, #tpu.memory_space<vmem>>, vector<1x4x256xf32>
    %6 = vector.shape_cast %5 : vector<1x4x256xf32> to vector<4x256xf32>
    %c0_4 = arith.constant 0 : index
    %c0_5 = arith.constant 0 : index
    %7 = vector.load %arg6[%c0_4, %c0_5] : memref<4x1xf32, #tpu.memory_space<vmem>>, vector<4x1xf32>
    %cst = arith.constant dense<0.000000e+00> : vector<4xf32>
    %8 = vector.multi_reduction <add>, %6, %cst [1] : vector<4x256xf32> to vector<4xf32>
    %9 = vector.shape_cast %8 : vector<4xf32> to vector<4x1xf32>
    %10 = arith.addf %7, %9 : vector<4x1xf32>
    %c0_6 = arith.constant 0 : index
    %c0_7 = arith.constant 0 : index
    %11 = vector.load %arg6[%c0_6, %c0_7] : memref<4x1xf32, #tpu.memory_space<vmem>>, vector<4x1xf32>
    tpu.vector_store %arg6[%c0_6, %c0_7], %10 {strides = array<i32>} : memref<4x1xf32, #tpu.memory_space<vmem>>, vector<4x1xf32>,
    %c0_8 = arith.constant 0 : index
    %c0_9 = arith.constant 0 : index
    %12 = vector.load %arg7[%c0_8, %c0_9] : memref<4x1xf32, #tpu.memory_space<vmem>>, vector<4x1xf32>
    %13 = arith.mulf %6, %6 : vector<4x256xf32>
    %cst_10 = arith.constant dense<0.000000e+00> : vector<4xf32>
    %14 = vector.multi_reduction <add>, %13, %cst_10 [1] : vector<4x256xf32> to vector<4xf32>
    %15 = vector.shape_cast %14 : vector<4xf32> to vector<4x1xf32>
    %16 = arith.addf %12, %15 : vector<4x1xf32>
    %c0_11 = arith.constant 0 : index
    %c0_12 = arith.constant 0 : index
    %17 = vector.load %arg7[%c0_11, %c0_12] : memref<4x1xf32, #tpu.memory_space<vmem>>, vector<4x1xf32>
    tpu.vector_store %arg7[%c0_11, %c0_12], %16 {strides = array<i32>} : memref<4x1xf32, #tpu.memory_space<vmem>>, vector<4x1xf32>,
    %c1_i32 = arith.constant 1 : i32
    %18 = arith.cmpi eq, %arg1, %c1_i32 : i32
    %c0_i32_13 = arith.constant 0 : i32
    %19 = arith.cmpi eq, %arg2, %c0_i32_13 : i32
    %20 = arith.andi %18, %19 : i1
    %21 = arith.extui %20 : i1 to i32
    %c0_i32_14 = arith.constant 0 : i32
    %22 = arith.cmpi ne, %21, %c0_i32_14 : i32
    scf.if %22 {
      %c0_15 = arith.constant 0 : index
      %c0_16 = arith.constant 0 : index
      %23 = vector.load %arg6[%c0_15, %c0_16] : memref<4x1xf32, #tpu.memory_space<vmem>>, vector<4x1xf32>
      %c0_17 = arith.constant 0 : index
      %c0_18 = arith.constant 0 : index
      %24 = vector.load %arg4[%c0_17, %c0_18] : memref<4x1xf32, #tpu.memory_space<vmem>>, vector<4x1xf32>
      tpu.vector_store %arg4[%c0_17, %c0_18], %23 {strides = array<i32>} : memref<4x1xf32, #tpu.memory_space<vmem>>, vector<4x1xf32>,
      %c0_19 = arith.constant 0 : index
      %c0_20 = arith.constant 0 : index
      %25 = vector.load %arg7[%c0_19, %c0_20] : memref<4x1xf32, #tpu.memory_space<vmem>>, vector<4x1xf32>
      %c0_21 = arith.constant 0 : index
      %c0_22 = arith.constant 0 : index
      %26 = vector.load %arg5[%c0_21, %c0_22] : memref<4x1xf32, #tpu.memory_space<vmem>>, vector<4x1xf32>
      tpu.vector_store %arg5[%c0_21, %c0_22], %25 {strides = array<i32>} : memref<4x1xf32, #tpu.memory_space<vmem>>, vector<4x1xf32>,
    } else {
    }
    return
  }
  func.func @transform_0(%arg0: i32, %arg1: i32, %arg2: i32) -> (i32, i32, i32) {
    %c0_i32 = arith.constant 0 : i32
    return %arg1, %arg0, %arg2 : i32, i32, i32
  }
  func.func @transform_1(%arg0: i32, %arg1: i32, %arg2: i32) -> (i32, i32) {
    %c0_i32 = arith.constant 0 : i32
    %c0_i32_0 = arith.constant 0 : i32
    return %arg0, %c0_i32 : i32, i32
  }
  func.func @transform_2(%arg0: i32, %arg1: i32, %arg2: i32) -> (i32, i32) {
    %c0_i32 = arith.constant 0 : i32
    %c0_i32_0 = arith.constant 0 : i32
    return %arg0, %c0_i32 : i32, i32
  }
}

</mosaic_0001>

<llo_original>
// kernel: tpu_custom_call.1
$region0: #{tpu_custom_call.1}
  #allocation0 [shape = 'u32[]', space=smem, size = 0x4, offset = 0x4, fixed_abs, tag = 'smem constant byte address 0x4 - core index']
  #allocation1 [shape = 'u32[144,128]{1,0:T(1,128)}', space=vmem, size = 0x12000, scoped, tag = 'internal scratch']
  #allocation2 [shape = 'f32[4,1]{1,0:T(4,128)}', space=vmem, size = 0x800, scoped, tag = 'scratch operand']
  #allocation3 [shape = 'f32[4,1]{1,0:T(4,128)}', space=vmem, size = 0x800, scoped, tag = 'scratch operand']
  %s0 = inlined_call_operand.hbm [shape: f32[2,4,256], index: 0, kind: input, shape index: {}]
  %s1 = inlined_call_operand.vmem [shape: f32[4,1], index: 1, kind: output, shape index: {0}]
  %s2 = inlined_call_operand.vmem [shape: f32[4,1], index: 2, kind: output, shape index: {1}]
  %3 = xla_tuple %s1, %s2
  %s4 = sld [smem:[#allocation0]]
  $region57: #{tpu_custom_call.1} parent=0
    _
  %s6 = ssub.s32 1, %s4
  %s7 = scalar_select 0, %s6, %s4
  $region1: #{tpu_custom_call.1} parent=0
    #allocation4 [shape = 'u8[8192]{0}', space=vmem, size = 0x2000, scoped, tag = 'input window, operand 0']
    #allocation5 [shape = 's32[2]{0}', space=sflag, size = 0x8, scoped, tag = 'scoped memory for tpu_custom_call.1']
    %8 = vsyncpa [#allocation5], 0
    %s9 = scalar_lea.sflag [#allocation5], 1
    %10 = vsyncpa %s9, 0
    loop: start=0, step=1, limit=4
    $region2: #{tpu_custom_call.1} parent=1 // loop_pre_header
      _
    $region3: #{tpu_custom_call.1} parent=1 // loop_header
      %s12 = sphi 0, %s16
      %p13 = scmp.ge.s32.totalorder %s12, 4
      %s19 = sphi 0, %s38
      %s20 = sphi 0, %s34
      %s21 = sphi 0, %s30
      %s22 = sphi 0, %s19
      %s23 = sphi 0, %s20
      %s24 = sphi 0, %s21
      %s25 = sphi 0, %s22
      %s26 = sphi 0, %s23
      %s27 = sphi 0, %s24
      %s45 = sphi 0, %s47
      %s48 = sphi 0, %s45
      %s49 = sphi 0, %s48
      %s65 = sphi 0, %s49
      %s71 = sphi 0, %s73
      %s74 = sphi 0, %s71
      %s75 = sphi 0, %s74
      %s91 = sphi 0, %s75
      %s97 = sphi 0, %s99
      %s100 = sphi 0, %s97
      %s101 = sphi 0, %s100
      %s117 = sphi 0, %s101
    $region4: #{tpu_custom_call.1} parent=1 // loop_header_branch
      %15 = sbr.rel (%p13) target = $region8
    $region5: #{tpu_custom_call.1} parent=1 // loop_body
      %s17 = ssub.s32 %s12, 1
      %s18 = ssub.s32 %s12, 2
      %s28 = sadd.s32 1, %s21
      %p29 = scmp.ge.s32.totalorder %s28, 1
      %s30 = scalar_select %p29, 0, %s28
      %s31 = sadd.s32 1, %s20
      %s32 = scalar_select %p29, %s31, %s20
      %p33 = scmp.ge.s32.totalorder %s32, 2
      %s34 = scalar_select %p33, 0, %s32
      %s35 = sadd.s32 1, %s19
      %s36 = scalar_select %p33, %s35, %s19
      %p37 = scmp.ge.s32.totalorder %s36, 1
      %s38 = scalar_select %p37, 0, %s36
      %s39 = ssub.s32 %s20, %s34
      %s40 = ssub.s32 %s19, %s38
      %s41 = sor.u32 %s39, %s40
      %s42 = ssub.s32 %s21, %s30
      %s43 = sor.u32 %s41, %s42
      %p44 = scmp.eq.s32.totalorder %s43, 0
      %s46 = sadd.s32 %s45, 1
      %s47 = scalar_select %p44, %s45, %s46
      %p50 = pneg %p44
      %p51 = scmp.eq.s32.totalorder %s12, 1
      %p52 = por %p50, %p51
      %p53 = scmp.ne.s32.totalorder %s45, %s48
      %p54 = scmp.eq.s32.totalorder %s12, 0
      %p55 = por %p53, %p54
      %p56 = scmp.ne.s32.totalorder %s45, %s48
      %p57 = scmp.eq.s32.totalorder %s17, 1
      %p58 = por %p56, %p57
      %p59 = scmp.ne.s32.totalorder %s48, %s49
      %p60 = scmp.eq.s32.totalorder %s17, 0
      %p61 = por %p59, %p60
      %p62 = scmp.ne.s32.totalorder %s48, %s49
      %p63 = scmp.eq.s32.totalorder %s18, 1
      %p64 = por %p62, %p63
      %p66 = scmp.ne.s32.totalorder %s49, %s65
      %p67 = scmp.eq.s32.totalorder %s18, 0
      %p68 = por %p66, %p67
      %s69 = ssub.s32 %s19, %s38
      %p70 = scmp.eq.s32.totalorder %s69, 0
      %s72 = sadd.s32 %s71, 1
      %s73 = scalar_select %p70, %s71, %s72
      %p76 = pneg %p70
      %p77 = scmp.eq.s32.totalorder %s12, 1
      %p78 = por %p76, %p77
      %p79 = scmp.ne.s32.totalorder %s71, %s74
      %p80 = scmp.eq.s32.totalorder %s12, 0
      %p81 = por %p79, %p80
      %p82 = scmp.ne.s32.totalorder %s71, %s74
      %p83 = scmp.eq.s32.totalorder %s17, 1
      %p84 = por %p82, %p83
      %p85 = scmp.ne.s32.totalorder %s74, %s75
      %p86 = scmp.eq.s32.totalorder %s17, 0
      %p87 = por %p85, %p86
      %p88 = scmp.ne.s32.totalorder %s74, %s75
      %p89 = scmp.eq.s32.totalorder %s18, 1
      %p90 = por %p88, %p89
      %p92 = scmp.ne.s32.totalorder %s75, %s91
      %p93 = scmp.eq.s32.totalorder %s18, 0
      %p94 = por %p92, %p93
      %s95 = ssub.s32 %s19, %s38
      %p96 = scmp.eq.s32.totalorder %s95, 0
      %s98 = sadd.s32 %s97, 1
      %s99 = scalar_select %p96, %s97, %s98
      %p102 = pneg %p96
      %p103 = scmp.eq.s32.totalorder %s12, 1
      %p104 = por %p102, %p103
      %p105 = scmp.ne.s32.totalorder %s97, %s100
      %p106 = scmp.eq.s32.totalorder %s12, 0
      %p107 = por %p105, %p106
      %p108 = scmp.ne.s32.totalorder %s97, %s100
      %p109 = scmp.eq.s32.totalorder %s17, 1
      %p110 = por %p108, %p109
      %p111 = scmp.ne.s32.totalorder %s100, %s101
      %p112 = scmp.eq.s32.totalorder %s17, 0
      %p113 = por %p111, %p112
      %p114 = scmp.ne.s32.totalorder %s100, %s101
      %p115 = scmp.eq.s32.totalorder %s18, 1
      %p116 = por %p114, %p115
      %p118 = scmp.ne.s32.totalorder %s101, %s117
      %p119 = scmp.eq.s32.totalorder %s18, 0
      %p120 = por %p118, %p119
      %p121 = scmp.le.s32.totalorder 1, %s12
      %p122 = scmp.lt.s32.totalorder %s12, 3
      %p123 = pnand %p121, %p122
      %p124 = pneg %p123
      // Predicated region
      $region9: #{tpu_custom_call.1} parent=5 // pred_check
        _
      $region10: #{tpu_custom_call.1} parent=5 // pred_check_branch
        %126 = sbr.rel (%p123) target = $region12
      $region11: #{tpu_custom_call.1} parent=5 // pred_region
        %s127 = ssub.s32 %s12, 1
      $region12: #{tpu_custom_call.1} parent=5 // pred_fallthru
        _
      %p128 = scmp.lt.s32.totalorder %s12, 2
      // Predicated region
      $region13: #{tpu_custom_call.1} parent=5 // pred_check
        %p129 = pneg %p128
      $region14: #{tpu_custom_call.1} parent=5 // pred_check_branch
        %131 = sbr.rel (%p129) target = $region16
      $region15: #{tpu_custom_call.1} parent=5 // pred_region
        // Predicated region
        $region17: #{tpu_custom_call.1} parent=15 // pred_check
          %p132 = pneg %p55
        $region18: #{tpu_custom_call.1} parent=15 // pred_check_branch
          %134 = sbr.rel (%p132) target = $region20
        $region19: #{tpu_custom_call.1} parent=15 // pred_region
          %s135 = sand.u32 %s45, 1
          %s136 = scalar_lea.sflag [#allocation5], %s135
          %s137 = sand.u32 %s45, 1
          %s138 = smul.addr %s137, 8
          %s139 = scalar_lea.vmem [#allocation4], %s138
          %s140 = smul.u32 2, %s21
          %s142 = ssub.s32 128, 128
          %143 = vsyncadd %s136, %s142
          %s144 = smul.addr %s19, 2
          %s145 = sadd.s32 %s140, %s144
          %s146 = smul.addr %s20, 2
          %s147 = sadd.s32 %s145, %s146
          %s148 = smul.addr %s147, 64
          %s149 = scalar_lea.hbm %s0, %s148
          %s151 = sshll.u32 %s139, 4
          %s152 = int_to_ptr.vmem [resolvable:$true] %s151
          %154 = dma.hbm_to_vmem [thread:$0]  %s149, 128, %s152, %s136
        $region20: #{tpu_custom_call.1} parent=15 // pred_fallthru
          _
      $region16: #{tpu_custom_call.1} parent=5 // pred_fallthru
        _
      %p155 = scmp.le.s32.totalorder 1, %s12
      %p156 = scmp.lt.s32.totalorder %s12, 3
      %p157 = pnand %p155, %p156
      %p158 = pneg %p157
      // Predicated region
      $region21: #{tpu_custom_call.1} parent=5 // pred_check
        _
      $region22: #{tpu_custom_call.1} parent=5 // pred_check_branch
        %160 = sbr.rel (%p157) target = $region24
      $region23: #{tpu_custom_call.1} parent=5 // pred_region
        %s161 = ssub.s32 %s12, 1
        %s162 = sand.u32 %s48, 1
        %s163 = scalar_lea.sflag [#allocation5], %s162
        %s164 = sand.u32 %s48, 1
        %s165 = smul.addr %s164, 8
        %s166 = scalar_lea.vmem [#allocation4], %s165
        // Predicated region
        $region25: #{tpu_custom_call.1} parent=23 // pred_check
          %p167 = pneg %p61
        $region26: #{tpu_custom_call.1} parent=23 // pred_check_branch
          %169 = sbr.rel (%p167) target = $region28
        $region27: #{tpu_custom_call.1} parent=23 // pred_region
          %170 = dma.done %s163, 128
        $region28: #{tpu_custom_call.1} parent=23 // pred_fallthru
          _
        %s171 = sand.u32 %s48, 1
        %s172 = scalar_lea.sflag [#allocation5], %s171
        %s173 = sand.u32 %s48, 1
        %s174 = smul.addr %s173, 8
        %s175 = scalar_lea.vmem [#allocation4], %s174
        %p176 = pneg %p61
        %p177 = pneg %p58
        %p178 = pneg %p87
        %p179 = pneg %p84
        %p180 = scmp.lt.s32.totalorder %s22, 0
        %s181 = scalar_select %p180, %s22, 0
        %s182 = smul.addr %s181, 4
        %s183 = scalar_lea.vmem %s1, %s182
        %p184 = pneg %p113
        %p185 = pneg %p110
        %p186 = scmp.lt.s32.totalorder %s22, 0
        %s187 = scalar_select %p186, %s22, 0
        %s188 = smul.addr %s187, 4
        %s189 = scalar_lea.vmem %s2, %s188
        %s190 = smul.u32 2, %s24
        %p191 = scmp.lt.s32.totalorder %s22, 0
        %s192 = scalar_select %p191, %s22, 0
        %s193 = smul.addr %s192, 4
        %s194 = scalar_lea.vmem %s1, %s193
        %p195 = scmp.lt.s32.totalorder %s22, 0
        %s196 = scalar_select %p195, %s22, 0
        %s197 = smul.addr %s196, 4
        %s198 = scalar_lea.vmem %s2, %s197
        %p199 = scmp.eq.s32.totalorder %s23, 0
        %p200 = scmp.eq.s32.totalorder %s24, 0
        %p201 = pnand %p199, %p200
        %p202 = pneg %p201
        // Predicated region
        $region29: #{tpu_custom_call.1} parent=23 // pred_check
          _
        $region30: #{tpu_custom_call.1} parent=23 // pred_check_branch
          %204 = sbr.rel (%p201) target = $region32
        $region31: #{tpu_custom_call.1} parent=23 // pred_region
          %vm205 = vcmask 3072
          %206 = vst.msk [vmem:[#allocation2] sm:$0xf] %vm205, 0.0
          %207 = vst.msk [vmem:[#allocation3] sm:$0xf] %vm205, 0.0
        $region32: #{tpu_custom_call.1} parent=23 // pred_fallthru
          _
        %v208 = vld [vmem:[%s166] sm:$0xff]
        %v209 = vld [vmem:[#allocation2] sm:$0xf]
        %v211 = vcombine.high %v208, %v208
        %vm213 = vcmask 1043456
        %v214 = vsel %vm213, %v208, 0.0
        %v215 = vsel %vm213, %v211, 0.0
        %v216 = vadd.f32 %v214, %v215
        %217 = vadd.xlane.f32.xlu0 %v216
        %v218 = vpop.xlane.xlu0 %217
        %v219 = vadd.f32 %v209, %v218
        %vm220 = vcmask 3072
        %221 = vst.msk [vmem:[#allocation2] sm:$0xf] %vm220, %v219
        %v222 = vld [vmem:[#allocation3] sm:$0xf]
        %v223 = vmul.f32 %v208, %v208
        %v225 = vcombine.high %v223, %v223
        %v227 = vsel %vm213, %v223, 0.0
        %v228 = vsel %vm213, %v225, 0.0
        %v229 = vadd.f32 %v227, %v228
        %230 = vadd.xlane.f32.xlu0 %v229
        %v231 = vpop.xlane.xlu0 %230
        %v232 = vadd.f32 %v222, %v231
        %233 = vst.msk [vmem:[#allocation3] sm:$0xf] %vm220, %v232
        %p234 = scmp.eq.s32.totalorder %s23, 1
        %p235 = pnand %p234, %p200
        %p236 = pneg %p235
        // Predicated region
        $region33: #{tpu_custom_call.1} parent=23 // pred_check
          _
        $region34: #{tpu_custom_call.1} parent=23 // pred_check_branch
          %238 = sbr.rel (%p235) target = $region36
        $region35: #{tpu_custom_call.1} parent=23 // pred_region
          %v239 = vld [vmem:[#allocation2] sm:$0xf]
          %240 = vst.msk [vmem:[%s194] sm:$0xf] %vm220, %v239
          %v241 = vld [vmem:[#allocation3] sm:$0xf]
          %242 = vst.msk [vmem:[%s198] sm:$0xf] %vm220, %v241
        $region36: #{tpu_custom_call.1} parent=23 // pred_fallthru
          _
        %p243 = scmp.lt.s32.totalorder %s22, 0
        %s244 = scalar_select %p243, %s22, 0
        %s245 = smul.addr %s244, 4
        %s246 = scalar_lea.vmem %s1, %s245
        %p247 = scmp.lt.s32.totalorder %s22, 0
        %s248 = scalar_select %p247, %s22, 0
        %s249 = smul.addr %s248, 4
        %s250 = scalar_lea.vmem %s2, %s249
        // Predicated region
        $region37: #{tpu_custom_call.1} parent=23 // pred_check
          %p251 = pneg %p84
        $region38: #{tpu_custom_call.1} parent=23 // pred_check_branch
          %253 = sbr.rel (%p251) target = $region40
        $region39: #{tpu_custom_call.1} parent=23 // pred_region
          _
        $region40: #{tpu_custom_call.1} parent=23 // pred_fallthru
          _
        // Predicated region
        $region41: #{tpu_custom_call.1} parent=23 // pred_check
          %p254 = pneg %p110
        $region42: #{tpu_custom_call.1} parent=23 // pred_check_branch
          %256 = sbr.rel (%p254) target = $region44
        $region43: #{tpu_custom_call.1} parent=23 // pred_region
          _
        $region44: #{tpu_custom_call.1} parent=23 // pred_fallthru
          _
        // Predicated region
        $region45: #{tpu_custom_call.1} parent=23 // pred_check
          %p257 = pneg %p84
        $region46: #{tpu_custom_call.1} parent=23 // pred_check_branch
          %259 = sbr.rel (%p257) target = $region48
        $region47: #{tpu_custom_call.1} parent=23 // pred_region
          %p260 = scmp.lt.s32.totalorder %s22, 0
          %s261 = scalar_select %p260, %s22, 0
          %s262 = smul.addr %s261, 4
          %s263 = scalar_lea.vmem %s1, %s262
        $region48: #{tpu_custom_call.1} parent=23 // pred_fallthru
          _
        // Predicated region
        $region49: #{tpu_custom_call.1} parent=23 // pred_check
          %p264 = pneg %p110
        $region50: #{tpu_custom_call.1} parent=23 // pred_check_branch
          %266 = sbr.rel (%p264) target = $region52
        $region51: #{tpu_custom_call.1} parent=23 // pred_region
          %p267 = scmp.lt.s32.totalorder %s22, 0
          %s268 = scalar_select %p267, %s22, 0
          %s269 = smul.addr %s268, 4
          %s270 = scalar_lea.vmem %s2, %s269
        $region52: #{tpu_custom_call.1} parent=23 // pred_fallthru
          _
      $region24: #{tpu_custom_call.1} parent=5 // pred_fallthru
        _
      %p271 = scmp.le.s32.totalorder 2, %s12
      // Predicated region
      $region53: #{tpu_custom_call.1} parent=5 // pred_check
        %p272 = pneg %p271
      $region54: #{tpu_custom_call.1} parent=5 // pred_check_branch
        %274 = sbr.rel (%p272) target = $region56
      $region55: #{tpu_custom_call.1} parent=5 // pred_region
        %s275 = ssub.s32 %s12, 2
      $region56: #{tpu_custom_call.1} parent=5 // pred_fallthru
        _
    $region6: #{tpu_custom_call.1} parent=1 // loop_footer
      %s16 = sadd.s32 1, %s12
    $region7: #{tpu_custom_call.1} parent=1 // loop_footer_branch
      %11 = sbr.rel target = $region3
    $region8: #{tpu_custom_call.1} parent=1 // loop_exit
      _
    %276 = vsyncpa [#allocation5], 1
    %s277 = scalar_lea.sflag [#allocation5], 1
    %278 = vsyncpa %s277, 1

</llo_original>
